<compile_context>
chip_gen: v7x
topology: tpu7x:2x2x1
jax: 0.10.0
libtpu: 0.0.40
codegen_flags: <defaults>
</compile_context>

<pallas_src>
import math

import jax
import jax.numpy as jnp
from jax.experimental import pallas as pl
from jax.experimental.pallas import tpu as pltpu


def _round_up(v, m):
    return ((v + m - 1) // m) * m


def _cdiv(a, b):
    return (a + b - 1) // b


def _vmem_budget_bytes():
    """~75% of physical VMEM (96 MiB on v5e/v6e, 48 MiB on v7x); safe fallback 48 MiB."""
    phys = 64 * 1024 * 1024
    try:
        phys = int(pltpu.get_tpu_info().vmem_capacity_bytes)
    except Exception:
        pass
    return min(phys * 3 // 4, 100 * 1024 * 1024)


def _num_tensorcores():
    """2 on megacore chips (v4 / v5p / v7x), else 1."""
    try:
        kind = jax.devices()[0].device_kind.lower()
    except Exception:
        return 1
    if "lite" in kind or "v5e" in kind or "v6" in kind:
        return 1
    return 2 if any(t in kind for t in ("v7", "v5p", "v4")) else 1


def _tile_candidates(total, unit=128):
    """Divisors of `total` that are multiples of `unit`, descending."""
    t = total // unit
    return [d * unit for d in range(t, 0, -1) if t % d == 0]


def _select_tiles(M, Kp, Np, x_isz, w_isz, out_isz, budget, num_tc, tm_cap=512):
    sub_m = 8 * max(1, 4 // x_isz)  # sublane packing of the activation row dim

    # Row tile: as large as possible (<= tm_cap) while minimizing padding of ragged M.
    n_m_blocks = _cdiv(M, tm_cap)
    tm = _round_up(_cdiv(M, n_m_blocks), sub_m)

    def fits(tm_, tn_, tk_):
        acc = 0 if tk_ == Kp else tm_ * tn_ * 4          # f32 acc only if K is tiled
        vmem = (2 * tm_ * tk_ * x_isz                    # x tile (double-buffered)
                + 2 * tk_ * tn_ * w_isz                  # weight tile
                + 2 * tn_ * 4                            # bias tile
                + 2 * tm_ * tn_ * out_isz                # output tile
                + acc)
        return vmem <= budget

    tn_cands = _tile_candidates(Np)
    tk_cands = _tile_candidates(Kp)

    while True:
        for tn in tn_cands:              # prefer full N: x streamed from HBM once
            for tk in tk_cands:          # prefer full K: no k axis / no acc scratch
                if fits(tm, tn, tk):
                    # Megacore: make sure both TensorCores get a parallel block.
                    if (num_tc >= 2 and Np // tn == 1 and _cdiv(M, tm) == 1
                            and M > sub_m):
                        tm = _round_up(_cdiv(M, 2), sub_m)
                    return tm, tn, tk
        if tm <= sub_m:
            return sub_m, tn_cands[-1], tk_cands[-1]
        tm = max(sub_m, _round_up(tm // 2, sub_m))


def _linear_relu_kernel(x_ref, w_ref, b_ref, o_ref):
    # tk == K: single-shot MXU matmul, bias + ReLU fused into the epilogue.
    acc = jnp.dot(x_ref[...].astype(w_ref.dtype), w_ref[...],
                  preferred_element_type=jnp.float32)
    o_ref[...] = jnp.maximum(acc + b_ref[...], 0.0).astype(o_ref.dtype)


def _linear_relu_kernel_acc(x_ref, w_ref, b_ref, o_ref, acc_ref):
    # K tiled: f32 accumulator persists across the (innermost) k grid axis.
    k = pl.program_id(2)

    @pl.when(k == 0)
    def _():
        acc_ref[...] = jnp.zeros_like(acc_ref)

    acc_ref[...] += jnp.dot(x_ref[...].astype(w_ref.dtype), w_ref[...],
                            preferred_element_type=jnp.float32)

    @pl.when(k == pl.num_programs(2) - 1)
    def _():
        o_ref[...] = jnp.maximum(acc_ref[...] + b_ref[...], 0.0).astype(o_ref.dtype)


def prepare_params(w_t, b, *, compute_dtype=jnp.bfloat16):
    """One-time weight prep: pad K/N to lane multiples and cast to the compute dtype.

    Done once at init so the per-call hot path never pads or casts the weight.
    w_t: [in_features, out_features] (transposed nn.Linear weight), b: [out_features].
    """
    # TODO(synk): optional fp8 weight storage with per-output-channel scales (v7x MXU).
    K, N = w_t.shape
    Kp, Np = _round_up(K, 128), _round_up(N, 128)
    w_p = jnp.pad(w_t, ((0, Kp - K), (0, Np - N))).astype(compute_dtype)
    b_p = jnp.pad(b.astype(jnp.float32), (0, Np - N)).reshape(1, Np)
    return {"w": w_p, "b": b_p, "in_features": K, "out_features": N}


def intermediate_forward(x, params, *, out_dtype=None, tm_cap=512):
    """relu(x @ W^T + b) with W pre-transposed / pre-padded / pre-cast by prepare_params."""
    w_p, b_p = params["w"], params["b"]
    K, N = params["in_features"], params["out_features"]
    Kp, Np = w_p.shape

    assert x.shape[-1] == K, (x.shape, K)
    lead = x.shape[:-1]
    x2 = x.reshape(-1, K)
    M = x2.shape[0]
    out_dtype = x.dtype if out_dtype is None else jnp.dtype(out_dtype)

    x_isz = jnp.dtype(x.dtype).itemsize
    w_isz = jnp.dtype(w_p.dtype).itemsize
    out_isz = jnp.dtype(out_dtype).itemsize

    budget = _vmem_budget_bytes()
    tm, tn, tk = _select_tiles(M, Kp, Np, x_isz, w_isz, out_isz, budget,
                               _num_tensorcores(), tm_cap=tm_cap)
    Mp = _round_up(M, tm)

    # Hot path only pads the activation (rows, plus K only if the layer width itself
    # is not lane-aligned).  Zero K-padding contributes nothing to the dot.
    if (Mp, Kp) != (M, K):
        x2 = jnp.pad(x2, ((0, Mp - M), (0, Kp - K)))

    k_steps = Kp // tk
    cost = pl.CostEstimate(
        flops=2 * Mp * Kp * Np,
        transcendentals=0,
        bytes_accessed=(Mp * Kp * x_isz + Kp * Np * w_isz + Np * 4
                        + Mp * Np * out_isz),
    )
    compiler_params = pltpu.CompilerParams(
        dimension_semantics=(("parallel", "parallel") if k_steps == 1 else
                             ("parallel", "parallel", "arbitrary")),
        vmem_limit_bytes=budget,
    )

    if k_steps == 1:
        out = pl.pallas_call(
            _linear_relu_kernel,
            out_shape=jax.ShapeDtypeStruct((Mp, Np), out_dtype),
            grid_spec=pltpu.PrefetchScalarGridSpec(
                num_scalar_prefetch=0,
                grid=(Mp // tm, Np // tn),
                in_specs=[
                    pl.BlockSpec((tm, Kp), lambda i, j: (i, 0)),
                    pl.BlockSpec((Kp, tn), lambda i, j: (0, j)),
                    pl.BlockSpec((1, tn), lambda i, j: (0, j)),
                ],
                out_specs=pl.BlockSpec((tm, tn), lambda i, j: (i, j)),
            ),
            compiler_params=compiler_params,
            cost_estimate=cost,
        )(x2, w_p, b_p)
    else:
        out = pl.pallas_call(
            _linear_relu_kernel_acc,
            out_shape=jax.ShapeDtypeStruct((Mp, Np), out_dtype),
            grid_spec=pltpu.PrefetchScalarGridSpec(
                num_scalar_prefetch=0,
                grid=(Mp // tm, Np // tn, k_steps),
                in_specs=[
                    pl.BlockSpec((tm, tk), lambda i, j, k: (i, k)),
                    pl.BlockSpec((tk, tn), lambda i, j, k: (k, j)),
                    pl.BlockSpec((1, tn), lambda i, j, k: (0, j)),
                ],
                out_specs=pl.BlockSpec((tm, tn), lambda i, j, k: (i, j)),
                scratch_shapes=[pltpu.VMEM((tm, tn), jnp.float32)],
            ),
            compiler_params=compiler_params,
            cost_estimate=cost,
        )(x2, w_p, b_p)

    if (Mp, Np) != (M, N):
        out = out[:M, :N]
    return out.reshape(*lead, N)


def init_params(hidden_size, key):
    """Deterministic init matching nn.Linear(hidden*4, hidden) defaults
    (uniform(-1/sqrt(fan_in), 1/sqrt(fan_in))); weight stored transposed [in, out]."""
    fan_in = hidden_size * 4
    bound = 1.0 / math.sqrt(fan_in)
    kw, kb = jax.random.split(key)
    w_t = jax.random.uniform(kw, (fan_in, hidden_size), jnp.float32, -bound, bound)
    b = jax.random.uniform(kb, (hidden_size,), jnp.float32, -bound, bound)
    return w_t, b


if __name__ == "__main__":
    hidden_size = 32          # -> in_features = 128, out_features = 32
    batch = 8

    key = jax.random.PRNGKey(0)
    kx, kp, kx2 = jax.random.split(key, 3)
    x = jax.random.normal(kx, (batch, hidden_size * 4), jnp.float32)
    w_t, b = init_params(hidden_size, kp)

    # Default path: bf16 operands on the MXU, f32 accumulation + f32 bias/ReLU epilogue.
    params_bf16 = prepare_params(w_t, b, compute_dtype=jnp.bfloat16)
    out = jax.block_until_ready(intermediate_forward(x, params_bf16))
    assert out.shape == (batch, hidden_size)
    ref_bf16 = jnp.maximum(
        jnp.dot(x.astype(jnp.bfloat16), w_t.astype(jnp.bfloat16),
                preferred_element_type=jnp.float32) + b, 0.0)
    assert jnp.allclose(out, ref_bf16, atol=5e-3, rtol=5e-3), "bf16 path mismatch"
    ref_f32 = jnp.maximum(x @ w_t + b, 0.0)
    assert jnp.allclose(out, ref_f32, atol=2e-2, rtol=2e-2), "bf16 vs f32 sanity"

    # Exact f32 compute path + ragged batch (not a multiple of the row tile).
    params_f32 = prepare_params(w_t, b, compute_dtype=jnp.float32)
    x_odd = jax.random.normal(kx2, (5, hidden_size * 4), jnp.float32)
    out_odd = jax.block_until_ready(intermediate_forward(x_odd, params_f32))
    ref_odd = jnp.maximum(x_odd @ w_t + b, 0.0)
    assert out_odd.shape == (5, hidden_size)
    assert jnp.allclose(out_odd, ref_odd, atol=1e-5, rtol=1e-5), "f32 path mismatch"

    print("KERNEL_OK")
</pallas_src>

<mosaic_0001>
module attributes {stable_mosaic.version = 11 : i64} {
  func.func @_linear_relu_kernel(%arg0: i32, %arg1: i32, %arg2: memref<8x128xf32, #tpu.memory_space<vmem>>, %arg3: memref<128x128xbf16, #tpu.memory_space<vmem>>, %arg4: memref<1x128xf32, #tpu.memory_space<vmem>>, %arg5: memref<8x128xf32, #tpu.memory_space<vmem>>) attributes {dimension_semantics = [#tpu.dimension_semantics<parallel>, #tpu.dimension_semantics<parallel>], iteration_bounds = array<i64: 1, 1>, scalar_prefetch = 0 : i64, scratch_operands = 0 : i64, tpu.core_type = #tpu.core_type<tc>, window_params = [{transform_indices = @transform_0, window_bounds = array<i64: 8, 128>}, {transform_indices = @transform_1, window_bounds = array<i64: 128, 128>}, {transform_indices = @transform_2, window_bounds = array<i64: 1, 128>}, {transform_indices = @transform_3, window_bounds = array<i64: 8, 128>}]} {
    %c0 = arith.constant 0 : index
    %c0_0 = arith.constant 0 : index
    %0 = vector.load %arg2[%c0, %c0_0] : memref<8x128xf32, #tpu.memory_space<vmem>>, vector<8x128xf32>
    %1 = arith.truncf %0 : vector<8x128xf32> to vector<8x128xbf16>
    %c0_1 = arith.constant 0 : index
    %c0_2 = arith.constant 0 : index
    %2 = vector.load %arg3[%c0_1, %c0_2] : memref<128x128xbf16, #tpu.memory_space<vmem>>, vector<128x128xbf16>
    %cst = arith.constant dense<0.000000e+00> : vector<8x128xf32>
    %3 = tpu.matmul %1, %2, %cst {dimension_numbers = #tpu.dot_dimension_numbers<[1], [0], [0], [1], [0, 0, 1, 1], [], []>} : vector<8x128xbf16>, vector<128x128xbf16>, vector<8x128xf32> -> vector<8x128xf32>
    %c0_3 = arith.constant 0 : index
    %c0_4 = arith.constant 0 : index
    %4 = vector.load %arg4[%c0_3, %c0_4] : memref<1x128xf32, #tpu.memory_space<vmem>>, vector<1x128xf32>
    %5 = vector.broadcast %4 : vector<1x128xf32> to vector<8x128xf32>
    %6 = arith.addf %3, %5 : vector<8x128xf32>
    %cst_5 = arith.constant 0.000000e+00 : f32
    %7 = vector.broadcast %cst_5 : f32 to vector<8x128xf32>
    %8 = arith.maximumf %6, %7 : vector<8x128xf32>
    %c0_6 = arith.constant 0 : index
    %c0_7 = arith.constant 0 : index
    %9 = vector.load %arg5[%c0_6, %c0_7] : memref<8x128xf32, #tpu.memory_space<vmem>>, vector<8x128xf32>
    tpu.vector_store %arg5[%c0_6, %c0_7], %8 {strides = array<i32>} : memref<8x128xf32, #tpu.memory_space<vmem>>, vector<8x128xf32>,
    return
  }
  func.func @transform_0(%arg0: i32, %arg1: i32) -> (i32, i32) {
    %c0_i32 = arith.constant 0 : i32
    %c0_i32_0 = arith.constant 0 : i32
    return %arg0, %c0_i32 : i32, i32
  }
  func.func @transform_1(%arg0: i32, %arg1: i32) -> (i32, i32) {
    %c0_i32 = arith.constant 0 : i32
    %c0_i32_0 = arith.constant 0 : i32
    return %c0_i32, %arg1 : i32, i32
  }
  func.func @transform_2(%arg0: i32, %arg1: i32) -> (i32, i32) {
    %c0_i32 = arith.constant 0 : i32
    %c0_i32_0 = arith.constant 0 : i32
    return %c0_i32, %arg1 : i32, i32
  }
  func.func @transform_3(%arg0: i32, %arg1: i32) -> (i32, i32) {
    %c0_i32 = arith.constant 0 : i32
    return %arg0, %arg1 : i32, i32
  }
}

</mosaic_0001>

<llo_original>
// kernel: tpu_custom_call.1
$region0: #{tpu_custom_call.1}
  #allocation0 [shape = 'u32[]', space=smem, size = 0x4, offset = 0x4, fixed_abs, tag = 'smem constant byte address 0x4 - core index']
  #allocation1 [shape = 'u32[144,128]{1,0:T(1,128)}', space=vmem, size = 0x12000, scoped, tag = 'internal scratch']
  %s0 = inlined_call_operand.hbm [shape: f32[8,128], index: 0, kind: input, shape index: {}]
  %s1 = inlined_call_operand.hbm [shape: bf16[128,128], index: 1, kind: input, shape index: {}]
  %s2 = inlined_call_operand.vmem [shape: f32[1,128], index: 2, kind: input, shape index: {}]
  %s3 = inlined_call_operand.hbm [shape: f32[8,128], index: 3, kind: output, shape index: {}]
  %s4 = sld [smem:[#allocation0]]
  $region30: #{tpu_custom_call.1} parent=0
    _
  %s6 = ssub.s32 1, %s4
  %s7 = scalar_select 0, %s6, %s4
  $region1: #{tpu_custom_call.1} parent=0
    #allocation2 [shape = 'u8[4096]{0}', space=vmem, size = 0x1000, scoped, tag = 'input window, operand 0, single buffered']
    #allocation3 [shape = 's32[1]{0}', space=sflag, size = 0x4, scoped, tag = 'scoped memory for tpu_custom_call.1']
    #allocation4 [shape = 's32[1]{0}', space=sflag, size = 0x4, scoped, tag = 'scoped memory for tpu_custom_call.1']
    #allocation5 [shape = 'u8[32768]{0}', space=vmem, size = 0x8000, scoped, tag = 'input window, operand 1, single buffered']
    #allocation6 [shape = 's32[1]{0}', space=sflag, size = 0x4, scoped, tag = 'scoped memory for tpu_custom_call.1']
    #allocation7 [shape = 'u8[4096]{0}', space=vmem, size = 0x1000, scoped, tag = 'output window, operand 0, single buffered']
    %8 = vsyncpa [#allocation3], 0
    %9 = vsyncpa [#allocation6], 0
    %10 = vsyncpa [#allocation4], 0
    // Predicated region
    $region2: #{tpu_custom_call.1} parent=1 // pred_check
      _
    $region3: #{tpu_custom_call.1} parent=1 // pred_check_branch
      %12 = sbr.rel (0) target = $region5
    $region4: #{tpu_custom_call.1} parent=1 // pred_region
      %s14 = ssub.s32 128, 128
      %15 = vsyncadd [#allocation3], %s14
      %s17 = sshll.u32 [#allocation2], 4
      %s18 = int_to_ptr.vmem [resolvable:$true] %s17
      %20 = dma.hbm_to_vmem [thread:$0]  %s0, 128, %s18, [#allocation3]
    $region5: #{tpu_custom_call.1} parent=1 // pred_fallthru
      _
    // Predicated region
    $region6: #{tpu_custom_call.1} parent=1 // pred_check
      _
    $region7: #{tpu_custom_call.1} parent=1 // pred_check_branch
      %22 = sbr.rel (0) target = $region9
    $region8: #{tpu_custom_call.1} parent=1 // pred_region
      %s24 = ssub.s32 1024, 1024
      %25 = vsyncadd [#allocation6], %s24
      %s26 = sshll.u32 [#allocation5], 4
      %s27 = int_to_ptr.vmem [resolvable:$true] %s26
      %32 = dma.hbm_to_vmem [thread:$0]  %s1, 1024, %s27, [#allocation6], 64, 64, 4
    $region9: #{tpu_custom_call.1} parent=1 // pred_fallthru
      _
    // Predicated region
    $region10: #{tpu_custom_call.1} parent=1 // pred_check
      _
    $region11: #{tpu_custom_call.1} parent=1 // pred_check_branch
      %34 = sbr.rel (0) target = $region13
    $region12: #{tpu_custom_call.1} parent=1 // pred_region
      _
    $region13: #{tpu_custom_call.1} parent=1 // pred_fallthru
      _
    // Predicated region
    $region14: #{tpu_custom_call.1} parent=1 // pred_check
      _
    $region15: #{tpu_custom_call.1} parent=1 // pred_check_branch
      %36 = sbr.rel (0) target = $region17
    $region16: #{tpu_custom_call.1} parent=1 // pred_region
      %37 = dma.done [#allocation3], 128
    $region17: #{tpu_custom_call.1} parent=1 // pred_fallthru
      _
    // Predicated region
    $region18: #{tpu_custom_call.1} parent=1 // pred_check
      _
    $region19: #{tpu_custom_call.1} parent=1 // pred_check_branch
      %39 = sbr.rel (0) target = $region21
    $region20: #{tpu_custom_call.1} parent=1 // pred_region
      %40 = dma.done [#allocation6], 1024
    $region21: #{tpu_custom_call.1} parent=1 // pred_fallthru
      _
    %v42 = vld [vmem:[#allocation2] sm:$0xff]
    %v43 = vpack.c.bf16 %v42, %v42
    %v44 = vld [vmem:[#allocation5] sm:$0xf]
    %v45 = vld [vmem:[#allocation5 + $0x4] sm:$0xf]
    %v46 = vld [vmem:[#allocation5 + $0x8] sm:$0xf]
    %v47 = vld [vmem:[#allocation5 + $0xc] sm:$0xf]
    %v48 = vld [vmem:[#allocation5 + $0x10] sm:$0xf]
    %v49 = vld [vmem:[#allocation5 + $0x14] sm:$0xf]
    %v50 = vld [vmem:[#allocation5 + $0x18] sm:$0xf]
    %v51 = vld [vmem:[#allocation5 + $0x1c] sm:$0xf]
    %v52 = vld [vmem:[#allocation5 + $0x20] sm:$0xf]
    %v53 = vld [vmem:[#allocation5 + $0x24] sm:$0xf]
    %v54 = vld [vmem:[#allocation5 + $0x28] sm:$0xf]
    %v55 = vld [vmem:[#allocation5 + $0x2c] sm:$0xf]
    %v56 = vld [vmem:[#allocation5 + $0x30] sm:$0xf]
    %v57 = vld [vmem:[#allocation5 + $0x34] sm:$0xf]
    %v58 = vld [vmem:[#allocation5 + $0x38] sm:$0xf]
    %v59 = vld [vmem:[#allocation5 + $0x3c] sm:$0xf]
    %v60 = vld [vmem:[%s2] sm:$0x1]
    %v62 = vlaneseq
    %v63 = vshrl.u32 %v62, 7
    %v64 = vsub.s32 0, %v63
    %v65 = vrot.slane %v60, %v64
    %v83 = vunpack.c.l.b16 %v44
    %v84 = vunpack.c.l.b16 %v45
    %v85 = vunpack.c.l.b16 %v46
    %v86 = vunpack.c.l.b16 %v47
    %v87 = vunpack.c.l.b16 %v48
    %v88 = vunpack.c.l.b16 %v49
    %v89 = vunpack.c.l.b16 %v50
    %v90 = vunpack.c.l.b16 %v51
    %v91 = vunpack.c.l.b16 %v52
    %v92 = vunpack.c.l.b16 %v53
    %v93 = vunpack.c.l.b16 %v54
    %v94 = vunpack.c.l.b16 %v55
    %v95 = vunpack.c.l.b16 %v56
    %v96 = vunpack.c.l.b16 %v57
    %v97 = vunpack.c.l.b16 %v58
    %v98 = vunpack.c.l.b16 %v59
    %v99 = vpack.c.b16 %v84, %v83
    %v100 = vpack.c.b16 %v86, %v85
    %v101 = vpack.c.b16 %v88, %v87
    %v102 = vpack.c.b16 %v90, %v89
    %v103 = vpack.c.b16 %v92, %v91
    %v104 = vpack.c.b16 %v94, %v93
    %v105 = vpack.c.b16 %v96, %v95
    %v106 = vpack.c.b16 %v98, %v97
    %115 = vmatprep.subr.bf16.mxu0 0
    %116 = vmatpush1.bf16.msra.mxu0 %v99
    %117 = vmatprep.subr.bf16.mxu0 0
    %118 = vmatpush1.bf16.msra.mxu0 %v100
    %119 = vmatprep.subr.bf16.mxu0 0
    %120 = vmatpush1.bf16.msra.mxu0 %v101
    %121 = vmatprep.subr.bf16.mxu0 0
    %122 = vmatpush1.bf16.msra.mxu0 %v102
    %123 = vmatprep.subr.bf16.mxu0 0
    %124 = vmatpush1.bf16.msra.mxu0 %v103
    %125 = vmatprep.subr.bf16.mxu0 0
    %126 = vmatpush1.bf16.msra.mxu0 %v104
    %127 = vmatprep.subr.bf16.mxu0 0
    %128 = vmatpush1.bf16.msra.mxu0 %v105
    %129 = vmatprep.subr.bf16.mxu0 0
    %130 = vmatpush1.bf16.msra.mxu0 %v106
    %131 = vmatprep.subr.bf16.mxu0 0
    %132 = vmatpush1.bf16.msra.mxu0 0
    %133 = vmatprep.subr.bf16.mxu0 0
    %134 = vmatpush1.bf16.msra.mxu0 0
    %135 = vmatprep.subr.bf16.mxu0 0
    %136 = vmatpush1.bf16.msra.mxu0 0
    %137 = vmatprep.subr.bf16.mxu0 0
    %138 = vmatpush1.bf16.msra.mxu0 0
    %139 = vmatprep.subr.bf16.mxu0 0
    %140 = vmatpush1.bf16.msra.mxu0 0
    %141 = vmatprep.subr.bf16.mxu0 0
    %142 = vmatpush1.bf16.msra.mxu0 0
    %143 = vmatprep.subr.bf16.mxu0 0
    %144 = vmatpush1.bf16.msra.mxu0 0
    %145 = vmatprep.subr.bf16.mxu0 0
    %146 = vmatpush1.bf16.msra.mxu0 0
    %147 = vmatprep.mubr.bf16.mxu0 0
    %148 = vmatmul.mubr.bf16.gmra.mrb[0].mxu0 %v43
    %v149 = vpop.f32.mrb[0].mxu0
    %v150 = vadd.f32 %v65, %v149
    %v151 = vpop.f32.mrb[0].mxu0
    %v152 = vpop.f32.mrb[0].mxu0
    %v153 = vpop.f32.mrb[0].mxu0
    %154 = vdwg.mxu0
    %v155 = vmax.f32 %v150, 0.0
    %156 = vst [vmem:[#allocation7] sm:$0xff] %v155
    // Predicated region
    $region22: #{tpu_custom_call.1} parent=1 // pred_check
      _
    $region23: #{tpu_custom_call.1} parent=1 // pred_check_branch
      %158 = sbr.rel (0) target = $region25
    $region24: #{tpu_custom_call.1} parent=1 // pred_region
      %s160 = ssub.s32 128, 128
      %161 = vsyncadd [#allocation4], %s160
      %s163 = sshll.u32 [#allocation7], 4
      %s164 = int_to_ptr.vmem [resolvable:$true] %s163
      %166 = dma.vmem_to_hbm [thread:$0]  %s164, 128, %s3, [#allocation4]
    $region25: #{tpu_custom_call.1} parent=1 // pred_fallthru
      _
    // Predicated region
    $region26: #{tpu_custom_call.1} parent=1 // pred_check
      _
    $region27: #{tpu_custom_call.1} parent=1 // pred_check_branch
      %168 = sbr.rel (0) target = $region29
    $region28: #{tpu_custom_call.1} parent=1 // pred_region
      %169 = dma.done [#allocation4], 128
    $region29: #{tpu_custom_call.1} parent=1 // pred_fallthru
      _
    %170 = vsyncpa [#allocation3], 1
    %171 = vsyncpa [#allocation6], 1
    %172 = vsyncpa [#allocation4], 1

</llo_original>
